<compile_context>
chip_gen: v6e
topology: v6e:2x2x1
jax: 0.10.0
libtpu: 0.0.40
codegen_flags: <defaults>
</compile_context>

<pallas_src>
import functools

import jax
import jax.numpy as jnp
from jax.experimental import pallas as pl
from jax.experimental.pallas import tpu as pltpu

F32 = jnp.float32
BF16 = jnp.bfloat16


# -----------------------------------------------------------------------------
# Fused kernel: channel-expand matmul + grouped LayerNorm
# -----------------------------------------------------------------------------

def _expand_ln_kernel(x_ref, w_ref, g_ref, b_ref, o_ref, *, cout, eps):
    # x_ref: (TM, C) f32 ; w_ref: (C, 2C) bf16 ; g_ref/b_ref: (1, cout) f32
    # o_ref: (TM, 2C) bf16, channels laid out as 4 (p1,p2) groups of width cout.
    x = x_ref[...].astype(w_ref.dtype)                       # in-kernel bf16 cast (VPU)
    y = jnp.dot(x, w_ref[...], preferred_element_type=F32)   # MXU, f32 accumulate
    tm = y.shape[0]
    gamma = jnp.broadcast_to(g_ref[...], (tm, cout))         # hoisted: once per tile
    beta = jnp.broadcast_to(b_ref[...], (tm, cout))
    inv_c = 1.0 / cout
    for g in range(4):                                       # 4 pixel-shuffle groups
        p = y[:, g * cout:(g + 1) * cout]                    # static lane slice
        mu = jnp.sum(p, axis=-1, keepdims=True) * inv_c
        ex2 = jnp.sum(p * p, axis=-1, keepdims=True) * inv_c
        var = ex2 - mu * mu                                  # one-pass variance
        inv = jax.lax.rsqrt(var + eps)                       # EUP rsqrt, f32
        o_ref[:, g * cout:(g + 1) * cout] = (
            (p - mu) * inv * gamma + beta).astype(o_ref.dtype)


# -----------------------------------------------------------------------------
# Tile picker (VMEM-budget aware, avoids padding, >= 8 grid steps when possible)
# -----------------------------------------------------------------------------

def _pick_row_tile(M, C, vmem_budget=24 << 20):
    def footprint(tm):
        in_b = tm * C * 4            # f32 activation block
        out_b = tm * 2 * C * 2       # bf16 output block
        w_b = C * 2 * C * 2          # bf16 weight (resident, count 2x to be safe)
        gb_b = 2 * (C // 2) * 4
        return 2 * (in_b + out_b) + 2 * (w_b + gb_b)

    candidates = [2048, 1024, 512, 256, 128, 64, 32, 16, 8]
    # prefer: divides M (no pad copy), >= 8 grid steps, fits the VMEM budget
    for tm in candidates:
        if M % tm == 0 and M // tm >= 8 and footprint(tm) <= vmem_budget:
            return tm, footprint(tm), False
    # relax the step-count requirement (small problems)
    for tm in candidates:
        if M % tm == 0 and footprint(tm) <= vmem_budget:
            return tm, footprint(tm), False
    # fallback: pad to a multiple of 8 rows
    return 8, footprint(8), True


# -----------------------------------------------------------------------------
# Forward wrapper
# -----------------------------------------------------------------------------

def patch_expand_forward(x, params, input_resolution):
    """PatchExpand forward. x is NCHW (B, C, H, W) or (B, H*W, C). Returns NCHW."""
    H, W = input_resolution
    if x.ndim == 4:
        B, C = x.shape[0], x.shape[1]
        assert x.shape[2] == H and x.shape[3] == W, "input feature has wrong size"
        rows = jnp.transpose(x, (0, 2, 3, 1)).reshape(B * H * W, C)   # NCHW -> rows
    else:
        B, L, C = x.shape
        assert L == H * W, "input feature has wrong size"
        rows = x.reshape(B * L, C)
    assert C % 2 == 0, "dim must be even for dim_scale=2"
    cout = C // 2

    M = B * H * W
    tm, fp, needs_pad = _pick_row_tile(M, C)
    Mp = M
    if needs_pad:
        Mp = ((M + tm - 1) // tm) * tm
        rows = jnp.pad(rows, ((0, Mp - M), (0, 0)))
    grid = (Mp // tm,)

    vmem_limit = int(min(48 << 20, max(16 << 20, 2 * fp)))

    y = pl.pallas_call(
        functools.partial(_expand_ln_kernel, cout=cout, eps=float(params["eps"])),
        out_shape=jax.ShapeDtypeStruct((Mp, 2 * C), BF16),
        grid=grid,
        in_specs=[
            pl.BlockSpec((tm, C), lambda i: (i, 0)),        # f32 activation row tile
            pl.BlockSpec((C, 2 * C), lambda i: (0, 0)),     # resident bf16 weight
            pl.BlockSpec((1, cout), lambda i: (0, 0)),      # LN gamma (f32)
            pl.BlockSpec((1, cout), lambda i: (0, 0)),      # LN beta  (f32)
        ],
        out_specs=pl.BlockSpec((tm, 2 * C), lambda i: (i, 0)),
        compiler_params=pltpu.CompilerParams(
            dimension_semantics=("parallel",),
            vmem_limit_bytes=vmem_limit,
        ),
    )(
        rows,                       # f32; cast to bf16 inside the kernel
        params["expand_w_bf16"],    # pre-cast once at init
        params["ln_gamma_2d"],
        params["ln_beta_2d"],
    )
    if needs_pad:
        y = y[:M]

    # Pixel shuffle + NCHW permute: pure layout plumbing in bf16, left to XLA.
    # rows ordered (b, h, w); channels ordered (p1, p2, c).
    y = y.reshape(B, H, W, 2, 2, cout)
    y = jnp.transpose(y, (0, 1, 3, 2, 4, 5)).reshape(B, 2 * H, 2 * W, cout)
    return jnp.transpose(y, (0, 3, 1, 2)).astype(x.dtype)   # NCHW (B, C//2, 2H, 2W)


# -----------------------------------------------------------------------------
# Synthetic parameters + pure-JAX reference (mirrors the PyTorch module)
# -----------------------------------------------------------------------------

def init_patch_expand_params(key, dim):
    k1, k2, k3 = jax.random.split(key, 3)
    w = 0.05 * jax.random.normal(k1, (dim, 2 * dim), dtype=F32)       # Linear, no bias
    gamma = 1.0 + 0.05 * jax.random.normal(k2, (dim // 2,), dtype=F32)
    beta = 0.05 * jax.random.normal(k3, (dim // 2,), dtype=F32)
    return dict(
        expand_w=w,
        expand_w_bf16=w.astype(BF16),                  # pre-cast once (kernel operand)
        ln_gamma=gamma,
        ln_beta=beta,
        ln_gamma_2d=gamma.reshape(1, dim // 2).astype(F32),
        ln_beta_2d=beta.reshape(1, dim // 2).astype(F32),
        eps=1e-5,                                      # static Python float
    )


def patch_expand_reference(x_nchw, params, input_resolution):
    H, W = input_resolution
    B, C = x_nchw.shape[0], x_nchw.shape[1]
    cout = C // 2
    x = jnp.transpose(x_nchw, (0, 2, 3, 1)).reshape(B, H * W, C)
    y = jnp.dot(x.astype(BF16), params["expand_w"].astype(BF16),
                preferred_element_type=F32)                           # (B, HW, 2C)
    y = y.reshape(B, H, W, 2, 2, cout)
    y = jnp.transpose(y, (0, 1, 3, 2, 4, 5)).reshape(B, 4 * H * W, cout)
    mu = jnp.mean(y, axis=-1, keepdims=True)
    var = jnp.mean((y - mu) ** 2, axis=-1, keepdims=True)
    y = (y - mu) * jax.lax.rsqrt(var + params["eps"]) * params["ln_gamma"] + params["ln_beta"]
    return jnp.transpose(y, (0, 2, 1)).reshape(B, cout, 2 * H, 2 * W)


# -----------------------------------------------------------------------------
# Demo
# -----------------------------------------------------------------------------

if __name__ == "__main__":
    batch, dim, H, W = 2, 64, 16, 16          # input_resolution = (16, 16), dim = 64

    key = jax.random.PRNGKey(0)
    kp, kx = jax.random.split(key)
    params = init_patch_expand_params(kp, dim)
    x = jax.random.normal(kx, (batch, dim, H, W), dtype=F32)          # NCHW input

    out = patch_expand_forward(x, params, (H, W))
    out = jax.block_until_ready(out)

    assert out.shape == (batch, dim // 2, 2 * H, 2 * W), out.shape
    assert bool(jnp.all(jnp.isfinite(out)))

    ref = patch_expand_reference(x, params, (H, W))
    err = float(jnp.max(jnp.abs(out.astype(F32) - ref)))
    assert err < 5e-2, f"mismatch vs reference: {err}"

    print("KERNEL_OK")
</pallas_src>

<mosaic_0001>
module attributes {stable_mosaic.version = 11 : i64} {
  func.func @_expand_ln_kernel(%arg0: i32, %arg1: memref<64x64xf32, #tpu.memory_space<vmem>>, %arg2: memref<64x128xbf16, #tpu.memory_space<vmem>>, %arg3: memref<1x32xf32, #tpu.memory_space<vmem>>, %arg4: memref<1x32xf32, #tpu.memory_space<vmem>>, %arg5: memref<64x128xbf16, #tpu.memory_space<vmem>>) attributes {dimension_semantics = [#tpu.dimension_semantics<parallel>], iteration_bounds = array<i64: 8>, scalar_prefetch = 0 : i64, scratch_operands = 0 : i64, tpu.core_type = #tpu.core_type<tc>, window_params = [{transform_indices = @transform_0, window_bounds = array<i64: 64, 64>}, {pipeline_mode = #tpu.pipeline_mode<synchronous>, transform_indices = @transform_1, window_bounds = array<i64: 64, 128>}, {pipeline_mode = #tpu.pipeline_mode<synchronous>, transform_indices = @transform_2, window_bounds = array<i64: 1, 32>}, {pipeline_mode = #tpu.pipeline_mode<synchronous>, transform_indices = @transform_3, window_bounds = array<i64: 1, 32>}, {transform_indices = @transform_4, window_bounds = array<i64: 64, 128>}]} {
    %c0 = arith.constant 0 : index
    %c0_0 = arith.constant 0 : index
    %0 = vector.load %arg1[%c0, %c0_0] : memref<64x64xf32, #tpu.memory_space<vmem>>, vector<64x64xf32>
    %1 = arith.truncf %0 : vector<64x64xf32> to vector<64x64xbf16>
    %c0_1 = arith.constant 0 : index
    %c0_2 = arith.constant 0 : index
    %2 = vector.load %arg2[%c0_1, %c0_2] : memref<64x128xbf16, #tpu.memory_space<vmem>>, vector<64x128xbf16>
    %cst = arith.constant dense<0.000000e+00> : vector<64x128xf32>
    %3 = tpu.matmul %1, %2, %cst {dimension_numbers = #tpu.dot_dimension_numbers<[1], [0], [0], [1], [0, 0, 1, 1], [], []>} : vector<64x64xbf16>, vector<64x128xbf16>, vector<64x128xf32> -> vector<64x128xf32>
    %c0_3 = arith.constant 0 : index
    %c0_4 = arith.constant 0 : index
    %4 = vector.load %arg3[%c0_3, %c0_4] : memref<1x32xf32, #tpu.memory_space<vmem>>, vector<1x32xf32>
    %5 = vector.shape_cast %4 : vector<1x32xf32> to vector<1x32xf32>
    %6 = vector.broadcast %5 : vector<1x32xf32> to vector<64x32xf32>
    %c0_5 = arith.constant 0 : index
    %c0_6 = arith.constant 0 : index
    %7 = vector.load %arg4[%c0_5, %c0_6] : memref<1x32xf32, #tpu.memory_space<vmem>>, vector<1x32xf32>
    %8 = vector.shape_cast %7 : vector<1x32xf32> to vector<1x32xf32>
    %9 = vector.broadcast %8 : vector<1x32xf32> to vector<64x32xf32>
    %10 = vector.extract_strided_slice %3 {offsets = [0, 0], sizes = [64, 32], strides = [1, 1]} : vector<64x128xf32> to vector<64x32xf32>
    %cst_7 = arith.constant dense<0.000000e+00> : vector<64xf32>
    %11 = vector.multi_reduction <add>, %10, %cst_7 [1] : vector<64x32xf32> to vector<64xf32>
    %12 = vector.shape_cast %11 : vector<64xf32> to vector<64x1xf32>
    %cst_8 = arith.constant 3.125000e-02 : f32
    %13 = vector.broadcast %cst_8 : f32 to vector<64x1xf32>
    %14 = arith.mulf %12, %13 : vector<64x1xf32>
    %15 = arith.mulf %10, %10 : vector<64x32xf32>
    %cst_9 = arith.constant dense<0.000000e+00> : vector<64xf32>
    %16 = vector.multi_reduction <add>, %15, %cst_9 [1] : vector<64x32xf32> to vector<64xf32>
    %17 = vector.shape_cast %16 : vector<64xf32> to vector<64x1xf32>
    %cst_10 = arith.constant 3.125000e-02 : f32
    %18 = vector.broadcast %cst_10 : f32 to vector<64x1xf32>
    %19 = arith.mulf %17, %18 : vector<64x1xf32>
    %20 = arith.mulf %14, %14 : vector<64x1xf32>
    %21 = arith.subf %19, %20 : vector<64x1xf32>
    %cst_11 = arith.constant 9.99999974E-6 : f32
    %22 = vector.broadcast %cst_11 : f32 to vector<64x1xf32>
    %23 = arith.addf %21, %22 : vector<64x1xf32>
    %24 = math.rsqrt %23 : vector<64x1xf32>
    %25 = vector.broadcast %14 : vector<64x1xf32> to vector<64x32xf32>
    %26 = arith.subf %10, %25 : vector<64x32xf32>
    %27 = vector.broadcast %24 : vector<64x1xf32> to vector<64x32xf32>
    %28 = arith.mulf %26, %27 : vector<64x32xf32>
    %29 = arith.mulf %28, %6 : vector<64x32xf32>
    %30 = arith.addf %29, %9 : vector<64x32xf32>
    %31 = arith.truncf %30 : vector<64x32xf32> to vector<64x32xbf16>
    %c0_12 = arith.constant 0 : index
    %c0_13 = arith.constant 0 : index
    %32 = vector.load %arg5[%c0_12, %c0_13] : memref<64x128xbf16, #tpu.memory_space<vmem>>, vector<64x32xbf16>
    tpu.vector_store %arg5[%c0_12, %c0_13], %31 {strides = array<i32>} : memref<64x128xbf16, #tpu.memory_space<vmem>>, vector<64x32xbf16>,
    %33 = vector.extract_strided_slice %3 {offsets = [0, 32], sizes = [64, 32], strides = [1, 1]} : vector<64x128xf32> to vector<64x32xf32>
    %cst_14 = arith.constant dense<0.000000e+00> : vector<64xf32>
    %34 = vector.multi_reduction <add>, %33, %cst_14 [1] : vector<64x32xf32> to vector<64xf32>
    %35 = vector.shape_cast %34 : vector<64xf32> to vector<64x1xf32>
    %cst_15 = arith.constant 3.125000e-02 : f32
    %36 = vector.broadcast %cst_15 : f32 to vector<64x1xf32>
    %37 = arith.mulf %35, %36 : vector<64x1xf32>
    %38 = arith.mulf %33, %33 : vector<64x32xf32>
    %cst_16 = arith.constant dense<0.000000e+00> : vector<64xf32>
    %39 = vector.multi_reduction <add>, %38, %cst_16 [1] : vector<64x32xf32> to vector<64xf32>
    %40 = vector.shape_cast %39 : vector<64xf32> to vector<64x1xf32>
    %cst_17 = arith.constant 3.125000e-02 : f32
    %41 = vector.broadcast %cst_17 : f32 to vector<64x1xf32>
    %42 = arith.mulf %40, %41 : vector<64x1xf32>
    %43 = arith.mulf %37, %37 : vector<64x1xf32>
    %44 = arith.subf %42, %43 : vector<64x1xf32>
    %cst_18 = arith.constant 9.99999974E-6 : f32
    %45 = vector.broadcast %cst_18 : f32 to vector<64x1xf32>
    %46 = arith.addf %44, %45 : vector<64x1xf32>
    %47 = math.rsqrt %46 : vector<64x1xf32>
    %48 = vector.broadcast %37 : vector<64x1xf32> to vector<64x32xf32>
    %49 = arith.subf %33, %48 : vector<64x32xf32>
    %50 = vector.broadcast %47 : vector<64x1xf32> to vector<64x32xf32>
    %51 = arith.mulf %49, %50 : vector<64x32xf32>
    %52 = arith.mulf %51, %6 : vector<64x32xf32>
    %53 = arith.addf %52, %9 : vector<64x32xf32>
    %54 = arith.truncf %53 : vector<64x32xf32> to vector<64x32xbf16>
    %c0_19 = arith.constant 0 : index
    %c32 = arith.constant 32 : index
    %55 = vector.load %arg5[%c0_19, %c32] : memref<64x128xbf16, #tpu.memory_space<vmem>>, vector<64x32xbf16>
    tpu.vector_store %arg5[%c0_19, %c32], %54 {strides = array<i32>} : memref<64x128xbf16, #tpu.memory_space<vmem>>, vector<64x32xbf16>,
    %56 = vector.extract_strided_slice %3 {offsets = [0, 64], sizes = [64, 32], strides = [1, 1]} : vector<64x128xf32> to vector<64x32xf32>
    %cst_20 = arith.constant dense<0.000000e+00> : vector<64xf32>
    %57 = vector.multi_reduction <add>, %56, %cst_20 [1] : vector<64x32xf32> to vector<64xf32>
    %58 = vector.shape_cast %57 : vector<64xf32> to vector<64x1xf32>
    %cst_21 = arith.constant 3.125000e-02 : f32
    %59 = vector.broadcast %cst_21 : f32 to vector<64x1xf32>
    %60 = arith.mulf %58, %59 : vector<64x1xf32>
    %61 = arith.mulf %56, %56 : vector<64x32xf32>
    %cst_22 = arith.constant dense<0.000000e+00> : vector<64xf32>
    %62 = vector.multi_reduction <add>, %61, %cst_22 [1] : vector<64x32xf32> to vector<64xf32>
    %63 = vector.shape_cast %62 : vector<64xf32> to vector<64x1xf32>
    %cst_23 = arith.constant 3.125000e-02 : f32
    %64 = vector.broadcast %cst_23 : f32 to vector<64x1xf32>
    %65 = arith.mulf %63, %64 : vector<64x1xf32>
    %66 = arith.mulf %60, %60 : vector<64x1xf32>
    %67 = arith.subf %65, %66 : vector<64x1xf32>
    %cst_24 = arith.constant 9.99999974E-6 : f32
    %68 = vector.broadcast %cst_24 : f32 to vector<64x1xf32>
    %69 = arith.addf %67, %68 : vector<64x1xf32>
    %70 = math.rsqrt %69 : vector<64x1xf32>
    %71 = vector.broadcast %60 : vector<64x1xf32> to vector<64x32xf32>
    %72 = arith.subf %56, %71 : vector<64x32xf32>
    %73 = vector.broadcast %70 : vector<64x1xf32> to vector<64x32xf32>
    %74 = arith.mulf %72, %73 : vector<64x32xf32>
    %75 = arith.mulf %74, %6 : vector<64x32xf32>
    %76 = arith.addf %75, %9 : vector<64x32xf32>
    %77 = arith.truncf %76 : vector<64x32xf32> to vector<64x32xbf16>
    %c0_25 = arith.constant 0 : index
    %c64 = arith.constant 64 : index
    %78 = vector.load %arg5[%c0_25, %c64] : memref<64x128xbf16, #tpu.memory_space<vmem>>, vector<64x32xbf16>
    tpu.vector_store %arg5[%c0_25, %c64], %77 {strides = array<i32>} : memref<64x128xbf16, #tpu.memory_space<vmem>>, vector<64x32xbf16>,
    %79 = vector.extract_strided_slice %3 {offsets = [0, 96], sizes = [64, 32], strides = [1, 1]} : vector<64x128xf32> to vector<64x32xf32>
    %cst_26 = arith.constant dense<0.000000e+00> : vector<64xf32>
    %80 = vector.multi_reduction <add>, %79, %cst_26 [1] : vector<64x32xf32> to vector<64xf32>
    %81 = vector.shape_cast %80 : vector<64xf32> to vector<64x1xf32>
    %cst_27 = arith.constant 3.125000e-02 : f32
    %82 = vector.broadcast %cst_27 : f32 to vector<64x1xf32>
    %83 = arith.mulf %81, %82 : vector<64x1xf32>
    %84 = arith.mulf %79, %79 : vector<64x32xf32>
    %cst_28 = arith.constant dense<0.000000e+00> : vector<64xf32>
    %85 = vector.multi_reduction <add>, %84, %cst_28 [1] : vector<64x32xf32> to vector<64xf32>
    %86 = vector.shape_cast %85 : vector<64xf32> to vector<64x1xf32>
    %cst_29 = arith.constant 3.125000e-02 : f32
    %87 = vector.broadcast %cst_29 : f32 to vector<64x1xf32>
    %88 = arith.mulf %86, %87 : vector<64x1xf32>
    %89 = arith.mulf %83, %83 : vector<64x1xf32>
    %90 = arith.subf %88, %89 : vector<64x1xf32>
    %cst_30 = arith.constant 9.99999974E-6 : f32
    %91 = vector.broadcast %cst_30 : f32 to vector<64x1xf32>
    %92 = arith.addf %90, %91 : vector<64x1xf32>
    %93 = math.rsqrt %92 : vector<64x1xf32>
    %94 = vector.broadcast %83 : vector<64x1xf32> to vector<64x32xf32>
    %95 = arith.subf %79, %94 : vector<64x32xf32>
    %96 = vector.broadcast %93 : vector<64x1xf32> to vector<64x32xf32>
    %97 = arith.mulf %95, %96 : vector<64x32xf32>
    %98 = arith.mulf %97, %6 : vector<64x32xf32>
    %99 = arith.addf %98, %9 : vector<64x32xf32>
    %100 = arith.truncf %99 : vector<64x32xf32> to vector<64x32xbf16>
    %c0_31 = arith.constant 0 : index
    %c96 = arith.constant 96 : index
    %101 = vector.load %arg5[%c0_31, %c96] : memref<64x128xbf16, #tpu.memory_space<vmem>>, vector<64x32xbf16>
    tpu.vector_store %arg5[%c0_31, %c96], %100 {strides = array<i32>} : memref<64x128xbf16, #tpu.memory_space<vmem>>, vector<64x32xbf16>,
    return
  }
  func.func @transform_0(%arg0: i32) -> (i32, i32) {
    %c0_i32 = arith.constant 0 : i32
    %c0_i32_0 = arith.constant 0 : i32
    return %arg0, %c0_i32 : i32, i32
  }
  func.func @transform_1(%arg0: i32) -> (i32, i32) {
    %c0_i32 = arith.constant 0 : i32
    %c0_i32_0 = arith.constant 0 : i32
    %c0_i32_1 = arith.constant 0 : i32
    return %c0_i32, %c0_i32_0 : i32, i32
  }
  func.func @transform_2(%arg0: i32) -> (i32, i32) {
    %c0_i32 = arith.constant 0 : i32
    %c0_i32_0 = arith.constant 0 : i32
    %c0_i32_1 = arith.constant 0 : i32
    return %c0_i32, %c0_i32_0 : i32, i32
  }
  func.func @transform_3(%arg0: i32) -> (i32, i32) {
    %c0_i32 = arith.constant 0 : i32
    %c0_i32_0 = arith.constant 0 : i32
    %c0_i32_1 = arith.constant 0 : i32
    return %c0_i32, %c0_i32_0 : i32, i32
  }
  func.func @transform_4(%arg0: i32) -> (i32, i32) {
    %c0_i32 = arith.constant 0 : i32
    %c0_i32_0 = arith.constant 0 : i32
    return %arg0, %c0_i32 : i32, i32
  }
}

</mosaic_0001>

<llo_original>
// kernel: tpu_custom_call.1
$region0: #{tpu_custom_call.1}
  #allocation0 [shape = 'u32[]', space=smem, size = 0x4, offset = 0x4, fixed_abs, tag = 'smem constant byte address 0x4 - core index']
  #allocation1 [shape = 'u32[144,128]{1,0:T(1,128)}', space=vmem, size = 0x12000, scoped, tag = 'internal scratch']
  %s0 = inlined_call_operand.vmem [shape: f32[512,64], index: 0, kind: input, shape index: {}]
  %s1 = inlined_call_operand.vmem [shape: bf16[64,128], index: 1, kind: input, shape index: {}]
  %s2 = inlined_call_operand.vmem [shape: f32[1,32], index: 2, kind: input, shape index: {}]
  %s3 = inlined_call_operand.vmem [shape: f32[1,32], index: 3, kind: input, shape index: {}]
  %s4 = inlined_call_operand.hbm [shape: bf16[512,128], index: 4, kind: output, shape index: {}]
  %s5 = sld [smem:[#allocation0]]
  $region49: #{tpu_custom_call.1} parent=0
    _
  %s7 = ssub.s32 1, %s5
  %s8 = scalar_select 0, %s7, %s5
  $region1: #{tpu_custom_call.1} parent=0
    #allocation2 [shape = 'u8[32768]{0}', space=vmem, size = 0x8000, scoped, tag = 'output window, operand 0']
    #allocation3 [shape = 's32[2]{0}', space=sflag, size = 0x8, scoped, tag = 'scoped memory for tpu_custom_call.1']
    %9 = vsyncpa [#allocation3], 0
    %s10 = scalar_lea.sflag [#allocation3], 1
    %11 = vsyncpa %s10, 0
    loop: start=0, step=1, limit=10
    $region2: #{tpu_custom_call.1} parent=1 // loop_pre_header
      _
    $region3: #{tpu_custom_call.1} parent=1 // loop_header
      %s13 = sphi 0, %s17
      %p14 = scmp.ge.s32.totalorder %s13, 10
      %s23 = sphi 0, %s25
      %s26 = sphi 0, %s23
      %s27 = sphi 0, %s26
      %s43 = sphi 0, %s27
      %s47 = sphi 0, %s47
      %s49 = sphi 0, %s47
      %s50 = sphi 0, %s49
      %s64 = sphi 0, %s50
      %s68 = sphi 0, %s68
      %s70 = sphi 0, %s68
      %s71 = sphi 0, %s70
      %s85 = sphi 0, %s71
      %s89 = sphi 0, %s89
      %s91 = sphi 0, %s89
      %s92 = sphi 0, %s91
      %s106 = sphi 0, %s92
      %s112 = sphi 0, %s114
      %s115 = sphi 0, %s112
      %s116 = sphi 0, %s115
      %s132 = sphi 0, %s116
    $region4: #{tpu_custom_call.1} parent=1 // loop_header_branch
      %16 = sbr.rel (%p14) target = $region8
    $region5: #{tpu_custom_call.1} parent=1 // loop_body
      %s18 = ssub.s32 %s13, 1
      %s19 = ssub.s32 %s13, 2
      %s20 = sadd.s32 %s13, 1
      %s21 = ssub.s32 %s13, %s20
      %p22 = scmp.eq.s32.totalorder %s21, 0
      %s24 = sadd.s32 %s23, 1
      %s25 = scalar_select %p22, %s23, %s24
      %p28 = pneg %p22
      %p29 = scmp.eq.s32.totalorder %s13, 7
      %p30 = por %p28, %p29
      %p31 = scmp.ne.s32.totalorder %s23, %s26
      %p32 = scmp.eq.s32.totalorder %s13, 0
      %p33 = por %p31, %p32
      %p34 = scmp.ne.s32.totalorder %s23, %s26
      %p35 = scmp.eq.s32.totalorder %s18, 7
      %p36 = por %p34, %p35
      %p37 = scmp.ne.s32.totalorder %s26, %s27
      %p38 = scmp.eq.s32.totalorder %s18, 0
      %p39 = por %p37, %p38
      %p40 = scmp.ne.s32.totalorder %s26, %s27
      %p41 = scmp.eq.s32.totalorder %s19, 7
      %p42 = por %p40, %p41
      %p44 = scmp.ne.s32.totalorder %s27, %s43
      %p45 = scmp.eq.s32.totalorder %s19, 0
      %p46 = por %p44, %p45
      %s48 = sadd.s32 %s47, 1
      %p51 = scmp.eq.s32.totalorder %s13, 7
      %p52 = scmp.ne.s32.totalorder %s47, %s49
      %p53 = scmp.eq.s32.totalorder %s13, 0
      %p54 = por %p52, %p53
      %p55 = scmp.ne.s32.totalorder %s47, %s49
      %p56 = scmp.eq.s32.totalorder %s18, 7
      %p57 = por %p55, %p56
      %p58 = scmp.ne.s32.totalorder %s49, %s50
      %p59 = scmp.eq.s32.totalorder %s18, 0
      %p60 = por %p58, %p59
      %p61 = scmp.ne.s32.totalorder %s49, %s50
      %p62 = scmp.eq.s32.totalorder %s19, 7
      %p63 = por %p61, %p62
      %p65 = scmp.ne.s32.totalorder %s50, %s64
      %p66 = scmp.eq.s32.totalorder %s19, 0
      %p67 = por %p65, %p66
      %s69 = sadd.s32 %s68, 1
      %p72 = scmp.eq.s32.totalorder %s13, 7
      %p73 = scmp.ne.s32.totalorder %s68, %s70
      %p74 = scmp.eq.s32.totalorder %s13, 0
      %p75 = por %p73, %p74
      %p76 = scmp.ne.s32.totalorder %s68, %s70
      %p77 = scmp.eq.s32.totalorder %s18, 7
      %p78 = por %p76, %p77
      %p79 = scmp.ne.s32.totalorder %s70, %s71
      %p80 = scmp.eq.s32.totalorder %s18, 0
      %p81 = por %p79, %p80
      %p82 = scmp.ne.s32.totalorder %s70, %s71
      %p83 = scmp.eq.s32.totalorder %s19, 7
      %p84 = por %p82, %p83
      %p86 = scmp.ne.s32.totalorder %s71, %s85
      %p87 = scmp.eq.s32.totalorder %s19, 0
      %p88 = por %p86, %p87
      %s90 = sadd.s32 %s89, 1
      %p93 = scmp.eq.s32.totalorder %s13, 7
      %p94 = scmp.ne.s32.totalorder %s89, %s91
      %p95 = scmp.eq.s32.totalorder %s13, 0
      %p96 = por %p94, %p95
      %p97 = scmp.ne.s32.totalorder %s89, %s91
      %p98 = scmp.eq.s32.totalorder %s18, 7
      %p99 = por %p97, %p98
      %p100 = scmp.ne.s32.totalorder %s91, %s92
      %p101 = scmp.eq.s32.totalorder %s18, 0
      %p102 = por %p100, %p101
      %p103 = scmp.ne.s32.totalorder %s91, %s92
      %p104 = scmp.eq.s32.totalorder %s19, 7
      %p105 = por %p103, %p104
      %p107 = scmp.ne.s32.totalorder %s92, %s106
      %p108 = scmp.eq.s32.totalorder %s19, 0
      %p109 = por %p107, %p108
      %s110 = ssub.s32 %s13, %s20
      %p111 = scmp.eq.s32.totalorder %s110, 0
      %s113 = sadd.s32 %s112, 1
      %s114 = scalar_select %p111, %s112, %s113
      %p117 = pneg %p111
      %p118 = scmp.eq.s32.totalorder %s13, 7
      %p119 = por %p117, %p118
      %p120 = scmp.ne.s32.totalorder %s112, %s115
      %p121 = scmp.eq.s32.totalorder %s13, 0
      %p122 = por %p120, %p121
      %p123 = scmp.ne.s32.totalorder %s112, %s115
      %p124 = scmp.eq.s32.totalorder %s18, 7
      %p125 = por %p123, %p124
      %p126 = scmp.ne.s32.totalorder %s115, %s116
      %p127 = scmp.eq.s32.totalorder %s18, 0
      %p128 = por %p126, %p127
      %p129 = scmp.ne.s32.totalorder %s115, %s116
      %p130 = scmp.eq.s32.totalorder %s19, 7
      %p131 = por %p129, %p130
      %p133 = scmp.ne.s32.totalorder %s116, %s132
      %p134 = scmp.eq.s32.totalorder %s19, 0
      %p135 = por %p133, %p134
      %p136 = scmp.le.s32.totalorder 1, %s13
      %p137 = scmp.lt.s32.totalorder %s13, 9
      %p138 = pnand %p136, %p137
      %p139 = pneg %p138
      // Predicated region
      $region9: #{tpu_custom_call.1} parent=5 // pred_check
        _
      $region10: #{tpu_custom_call.1} parent=5 // pred_check_branch
        %141 = sbr.rel (%p138) target = $region12
      $region11: #{tpu_custom_call.1} parent=5 // pred_region
        %s142 = ssub.s32 %s13, 1
        // Predicated region
        $region13: #{tpu_custom_call.1} parent=11 // pred_check
          %p143 = pneg %p60
        $region14: #{tpu_custom_call.1} parent=11 // pred_check_branch
          %145 = sbr.rel (%p143) target = $region16
        $region15: #{tpu_custom_call.1} parent=11 // pred_region
          _
        $region16: #{tpu_custom_call.1} parent=11 // pred_fallthru
          _
        // Predicated region
        $region17: #{tpu_custom_call.1} parent=11 // pred_check
          %p146 = pneg %p81
        $region18: #{tpu_custom_call.1} parent=11 // pred_check_branch
          %148 = sbr.rel (%p146) target = $region20
        $region19: #{tpu_custom_call.1} parent=11 // pred_region
          _
        $region20: #{tpu_custom_call.1} parent=11 // pred_fallthru
          _
        // Predicated region
        $region21: #{tpu_custom_call.1} parent=11 // pred_check
          %p149 = pneg %p102
        $region22: #{tpu_custom_call.1} parent=11 // pred_check_branch
          %151 = sbr.rel (%p149) target = $region24
        $region23: #{tpu_custom_call.1} parent=11 // pred_region
          _
        $region24: #{tpu_custom_call.1} parent=11 // pred_fallthru
          _
      $region12: #{tpu_custom_call.1} parent=5 // pred_fallthru
        _
      %p152 = scmp.lt.s32.totalorder %s13, 8
      // Predicated region
      $region25: #{tpu_custom_call.1} parent=5 // pred_check
        %p153 = pneg %p152
      $region26: #{tpu_custom_call.1} parent=5 // pred_check_branch
        %155 = sbr.rel (%p153) target = $region28
      $region27: #{tpu_custom_call.1} parent=5 // pred_region
        // Predicated region
        $region29: #{tpu_custom_call.1} parent=27 // pred_check
          %p156 = pneg %p33
        $region30: #{tpu_custom_call.1} parent=27 // pred_check_branch
          %158 = sbr.rel (%p156) target = $region32
        $region31: #{tpu_custom_call.1} parent=27 // pred_region
          %s159 = smul.u32 8, %s13
          %p160 = scmp.lt.s32.totalorder %s159, 63
          %s161 = scalar_select %p160, %s159, 63
          %s162 = smul.addr %s161, 8
          %s163 = scalar_lea.vmem %s0, %s162
          %s164 = smul.u32 8, %s13
        $region32: #{tpu_custom_call.1} parent=27 // pred_fallthru
          _
      $region28: #{tpu_custom_call.1} parent=5 // pred_fallthru
        _
      %p165 = scmp.le.s32.totalorder 1, %s13
      %p166 = scmp.lt.s32.totalorder %s13, 9
      %p167 = pnand %p165, %p166
      %p168 = pneg %p167
      // Predicated region
      $region33: #{tpu_custom_call.1} parent=5 // pred_check
        _
      $region34: #{tpu_custom_call.1} parent=5 // pred_check_branch
        %170 = sbr.rel (%p167) target = $region36
      $region35: #{tpu_custom_call.1} parent=5 // pred_region
        %s171 = ssub.s32 %s13, 1
        %s172 = smul.u32 8, %s18
        %p173 = scmp.lt.s32.totalorder %s172, 63
        %s174 = scalar_select %p173, %s172, 63
        %s175 = smul.addr %s174, 8
        %s176 = scalar_lea.vmem %s0, %s175
        %p177 = pneg %p39
        %p178 = pneg %p36
        %p179 = pneg %p60
        %p180 = pneg %p57
        %p181 = pneg %p81
        %p182 = pneg %p78
        %p183 = pneg %p102
        %p184 = pneg %p99
        %p185 = pneg %p128
        %p186 = pneg %p125
        %s187 = sand.u32 %s115, 1
        %s188 = scalar_lea.sflag [#allocation3], %s187
        %s189 = sand.u32 %s115, 1
        %s190 = smul.addr %s189, 32
        %s191 = scalar_lea.vmem [#allocation2], %s190
        %s192 = smul.u32 8, %s18
        %p193 = scmp.lt.s32.totalorder %s192, 63
        %s194 = scalar_select %p193, %s192, 63
        %s195 = smul.addr %s194, 8
        %s196 = scalar_lea.vmem %s0, %s195
        %s197 = smul.u32 8, %s18
        %s198 = smul.u32 8, %s18
        %v200 = vld [vmem:[%s196] sm:$0xff]
        %v201 = vld [vmem:[%s196 + $0x8] sm:$0xff]
        %v202 = vld [vmem:[%s196 + $0x10] sm:$0xff]
        %v203 = vld [vmem:[%s196 + $0x18] sm:$0xff]
        %v204 = vld [vmem:[%s196 + $0x20] sm:$0xff]
        %v205 = vld [vmem:[%s196 + $0x28] sm:$0xff]
        %v206 = vld [vmem:[%s196 + $0x30] sm:$0xff]
        %v207 = vld [vmem:[%s196 + $0x38] sm:$0xff]
        %v208 = vpack.c.bf16 %v201, %v200
        %v209 = vpack.c.bf16 %v203, %v202
        %v210 = vpack.c.bf16 %v205, %v204
        %v211 = vpack.c.bf16 %v207, %v206
        %v212 = vld [vmem:[%s1] sm:$0xf]
        %v213 = vld [vmem:[%s1 + $0x4] sm:$0xf]
        %v214 = vld [vmem:[%s1 + $0x8] sm:$0xf]
        %v215 = vld [vmem:[%s1 + $0xc] sm:$0xf]
        %v216 = vld [vmem:[%s1 + $0x10] sm:$0xf]
        %v217 = vld [vmem:[%s1 + $0x14] sm:$0xf]
        %v218 = vld [vmem:[%s1 + $0x18] sm:$0xf]
        %v219 = vld [vmem:[%s1 + $0x1c] sm:$0xf]
        %v228 = vunpack.c.l.b16 %v212
        %v229 = vunpack.c.l.b16 %v213
        %v230 = vunpack.c.l.b16 %v214
        %v231 = vunpack.c.l.b16 %v215
        %v232 = vunpack.c.l.b16 %v216
        %v233 = vunpack.c.l.b16 %v217
        %v234 = vunpack.c.l.b16 %v218
        %v235 = vunpack.c.l.b16 %v219
        %v236 = vpack.c.b16 %v229, %v228
        %v237 = vpack.c.b16 %v231, %v230
        %v238 = vpack.c.b16 %v233, %v232
        %v239 = vpack.c.b16 %v235, %v234
        %vm244 = vcmask 523264
        %v246 = vsel %vm244, %v208, 0
        %v249 = vsel %vm244, %v209, 0
        %v252 = vsel %vm244, %v210, 0
        %v255 = vsel %vm244, %v211, 0
        %257 = vmatprep.subr.bf16.mxu0 0
        %258 = vmatpush1.bf16.msra.mxu0 0
        %259 = vmatprep.subr.bf16.mxu0 0
        %260 = vmatpush1.bf16.msra.mxu0 0
        %261 = vmatprep.subr.bf16.mxu0 0
        %262 = vmatpush1.bf16.msra.mxu0 0
        %263 = vmatprep.subr.bf16.mxu0 0
        %264 = vmatpush1.bf16.msra.mxu0 0
        %265 = vmatprep.subr.bf16.mxu0 0
        %266 = vmatpush1.bf16.msra.mxu0 %v239
        %267 = vmatprep.subr.bf16.mxu0 0
        %268 = vmatpush1.bf16.msra.mxu0 %v238
        %269 = vmatprep.subr.bf16.mxu0 0
        %270 = vmatpush1.bf16.msra.mxu0 %v237
        %271 = vmatprep.subr.bf16.mxu0 0
        %272 = vmatpush1.bf16.msra.mxu0 %v236
        %273 = vmatprep.subr.bf16.mxu0 0
        %274 = vmatpush2.bf16.msra.mxu0 0
        %275 = vmatprep.subr.bf16.mxu0 0
        %276 = vmatpush2.bf16.msra.mxu0 0
        %277 = vmatprep.subr.bf16.mxu0 0
        %278 = vmatpush2.bf16.msra.mxu0 0
        %279 = vmatprep.subr.bf16.mxu0 0
        %280 = vmatpush2.bf16.msra.mxu0 0
        %281 = vmatprep.subr.bf16.mxu0 0
        %282 = vmatpush2.bf16.msra.mxu0 0
        %283 = vmatprep.subr.bf16.mxu0 0
        %284 = vmatpush2.bf16.msra.mxu0 0
        %285 = vmatprep.subr.bf16.mxu0 0
        %286 = vmatpush2.bf16.msra.mxu0 0
        %287 = vmatprep.subr.bf16.mxu0 0
        %288 = vmatpush2.bf16.msra.mxu0 0
        %289 = vmatprep.mubr.bf16.mxu0 0
        %290 = vmatmul.mubr.bf16.gmra.mxu0 %v246
        %v291 = vpop.f32.mrf.mxu0
        %v292 = vadd.f32 0.0, %v291
        %v293 = vpop.f32.mrf.mxu0
        %v294 = vpop.f32.mrf.mxu0
        %v295 = vadd.f32 0.0, %v294
        %v296 = vpop.f32.mrf.mxu0
        %297 = vmatprep.mubr.bf16.mxu0 0
        %298 = vmatmul.mubr.bf16.gmra.mxu0 %v249
        %v299 = vpop.f32.mrf.mxu0
        %v300 = vadd.f32 0.0, %v299
        %v301 = vpop.f32.mrf.mxu0
        %v302 = vpop.f32.mrf.mxu0
        %v303 = vadd.f32 0.0, %v302
        %v304 = vpop.f32.mrf.mxu0
        %305 = vmatprep.mubr.bf16.mxu0 0
        %306 = vmatmul.mubr.bf16.gmra.mxu0 %v252
        %v307 = vpop.f32.mrf.mxu0
        %v308 = vadd.f32 0.0, %v307
        %v309 = vpop.f32.mrf.mxu0
        %v310 = vpop.f32.mrf.mxu0
        %v311 = vadd.f32 0.0, %v310
        %v312 = vpop.f32.mrf.mxu0
        %313 = vmatprep.mubr.bf16.mxu0 0
        %314 = vmatmul.mubr.bf16.gmra.mxu0 %v255
        %v315 = vpop.f32.mrf.mxu0
        %v316 = vadd.f32 0.0, %v315
        %v317 = vpop.f32.mrf.mxu0
        %v318 = vpop.f32.mrf.mxu0
        %v319 = vadd.f32 0.0, %v318
        %v320 = vpop.f32.mrf.mxu0
        %321 = vdwg.mxu0
        %v322 = vld [vmem:[%s2] sm:$0x1]
        %v324 = vlaneseq
        %v325 = vshrl.u32 %v324, 7
        %v326 = vsub.s32 0, %v325
        %v327 = vrot.slane %v322, %v326
        %v329 = vld [vmem:[%s3] sm:$0x1]
        %v331 = vlaneseq
        %v332 = vshrl.u32 %v331, 7
        %v333 = vsub.s32 0, %v332
        %v334 = vrot.slane %v329, %v333
        %vm336 = vcmask 261120
        %v337 = vsel %vm336, %v292, 0.0
        %338 = vadd.xlane.f32.xlu0 %v337
        %v339 = vpop.xlane.xlu0 %338
        %v340 = vsel %vm336, %v295, 0.0
        %341 = vadd.xlane.f32.xlu0 %v340
        %v342 = vpop.xlane.xlu0 %341
        %v343 = vsel %vm336, %v300, 0.0
        %344 = vadd.xlane.f32.xlu0 %v343
        %v345 = vpop.xlane.xlu0 %344
        %v346 = vsel %vm336, %v303, 0.0
        %347 = vadd.xlane.f32.xlu0 %v346
        %v348 = vpop.xlane.xlu0 %347
        %v349 = vsel %vm336, %v308, 0.0
        %350 = vadd.xlane.f32.xlu0 %v349
        %v351 = vpop.xlane.xlu0 %350
        %v352 = vsel %vm336, %v311, 0.0
        %353 = vadd.xlane.f32.xlu0 %v352
        %v354 = vpop.xlane.xlu0 %353
        %v355 = vsel %vm336, %v316, 0.0
        %356 = vadd.xlane.f32.xlu0 %v355
        %v357 = vpop.xlane.xlu0 %356
        %v358 = vsel %vm336, %v319, 0.0
        %359 = vadd.xlane.f32.xlu0 %v358
        %v360 = vpop.xlane.xlu0 %359
        %v361 = vmul.f32 %v339, 0.03125
        %v362 = vmul.f32 %v342, 0.03125
        %v363 = vmul.f32 %v345, 0.03125
        %v364 = vmul.f32 %v348, 0.03125
        %v365 = vmul.f32 %v351, 0.03125
        %v366 = vmul.f32 %v354, 0.03125
        %v367 = vmul.f32 %v357, 0.03125
        %v368 = vmul.f32 %v360, 0.03125
        %v369 = vmul.f32 %v292, %v292
        %v370 = vmul.f32 %v295, %v295
        %v371 = vmul.f32 %v300, %v300
        %v372 = vmul.f32 %v303, %v303
        %v373 = vmul.f32 %v308, %v308
        %v374 = vmul.f32 %v311, %v311
        %v375 = vmul.f32 %v316, %v316
        %v376 = vmul.f32 %v319, %v319
        %v377 = vsel %vm336, %v369, 0.0
        %378 = vadd.xlane.f32.xlu0 %v377
        %v379 = vpop.xlane.xlu0 %378
        %v380 = vsel %vm336, %v370, 0.0
        %381 = vadd.xlane.f32.xlu0 %v380
        %v382 = vpop.xlane.xlu0 %381
        %v383 = vsel %vm336, %v371, 0.0
        %384 = vadd.xlane.f32.xlu0 %v383
        %v385 = vpop.xlane.xlu0 %384
        %v386 = vsel %vm336, %v372, 0.0
        %387 = vadd.xlane.f32.xlu0 %v386
        %v388 = vpop.xlane.xlu0 %387
        %v389 = vsel %vm336, %v373, 0.0
        %390 = vadd.xlane.f32.xlu0 %v389
        %v391 = vpop.xlane.xlu0 %390
        %v392 = vsel %vm336, %v374, 0.0
        %393 = vadd.xlane.f32.xlu0 %v392
        %v394 = vpop.xlane.xlu0 %393
        %v395 = vsel %vm336, %v375, 0.0
        %396 = vadd.xlane.f32.xlu0 %v395
        %v397 = vpop.xlane.xlu0 %396
        %v398 = vsel %vm336, %v376, 0.0
        %399 = vadd.xlane.f32.xlu0 %v398
        %v400 = vpop.xlane.xlu0 %399
        %v401 = vmul.f32 %v379, 0.03125
        %v402 = vmul.f32 %v382, 0.03125
        %v403 = vmul.f32 %v385, 0.03125
        %v404 = vmul.f32 %v388, 0.03125
        %v405 = vmul.f32 %v391, 0.03125
        %v406 = vmul.f32 %v394, 0.03125
        %v407 = vmul.f32 %v397, 0.03125
        %v408 = vmul.f32 %v400, 0.03125
        %v409 = vmul.f32 %v361, %v361
        %v410 = vmul.f32 %v362, %v362
        %v411 = vmul.f32 %v363, %v363
        %v412 = vmul.f32 %v364, %v364
        %v413 = vmul.f32 %v365, %v365
        %v414 = vmul.f32 %v366, %v366
        %v415 = vmul.f32 %v367, %v367
        %v416 = vmul.f32 %v368, %v368
        %v417 = vsub.f32 %v401, %v409
        %v418 = vsub.f32 %v402, %v410
        %v419 = vsub.f32 %v403, %v411
        %v420 = vsub.f32 %v404, %v412
        %v421 = vsub.f32 %v405, %v413
        %v422 = vsub.f32 %v406, %v414
        %v423 = vsub.f32 %v407, %v415
        %v424 = vsub.f32 %v408, %v416
        %v425 = vadd.f32 %v417, 1e-05
        %v426 = vadd.f32 %v418, 1e-05
        %v427 = vadd.f32 %v419, 1e-05
        %v428 = vadd.f32 %v420, 1e-05
        %v429 = vadd.f32 %v421, 1e-05
        %v430 = vadd.f32 %v422, 1e-05
        %v431 = vadd.f32 %v423, 1e-05
        %v432 = vadd.f32 %v424, 1e-05
        %v433 = vrsqrt.pop %v425
        %v434 = vrsqrt.pop %v426
        %v435 = vrsqrt.pop %v427
        %v436 = vrsqrt.pop %v428
        %v437 = vrsqrt.pop %v429
        %v438 = vrsqrt.pop %v430
        %v439 = vrsqrt.pop %v431
        %v440 = vrsqrt.pop %v432
        %v441 = vsub.f32 %v292, %v361
        %v442 = vsub.f32 %v295, %v362
        %v443 = vsub.f32 %v300, %v363
        %v444 = vsub.f32 %v303, %v364
        %v445 = vsub.f32 %v308, %v365
        %v446 = vsub.f32 %v311, %v366
        %v447 = vsub.f32 %v316, %v367
        %v448 = vsub.f32 %v319, %v368
        %v449 = vmul.f32 %v441, %v433
        %v450 = vmul.f32 %v442, %v434
        %v451 = vmul.f32 %v443, %v435
        %v452 = vmul.f32 %v444, %v436
        %v453 = vmul.f32 %v445, %v437
        %v454 = vmul.f32 %v446, %v438
        %v455 = vmul.f32 %v447, %v439
        %v456 = vmul.f32 %v448, %v440
        %v457 = vmul.f32 %v449, %v327
        %v458 = vmul.f32 %v450, %v327
        %v459 = vmul.f32 %v451, %v327
        %v460 = vmul.f32 %v452, %v327
        %v461 = vmul.f32 %v453, %v327
        %v462 = vmul.f32 %v454, %v327
        %v463 = vmul.f32 %v455, %v327
        %v464 = vmul.f32 %v456, %v327
        %v465 = vadd.f32 %v457, %v334
        %v466 = vadd.f32 %v458, %v334
        %v467 = vadd.f32 %v459, %v334
        %v468 = vadd.f32 %v460, %v334
        %v469 = vadd.f32 %v461, %v334
        %v470 = vadd.f32 %v462, %v334
        %v471 = vadd.f32 %v463, %v334
        %v472 = vadd.f32 %v464, %v334
        %v473 = vpack.c.bf16 %v466, %v465
        %v474 = vpack.c.bf16 %v468, %v467
        %v475 = vpack.c.bf16 %v470, %v469
        %v476 = vpack.c.bf16 %v472, %v471
        %v481 = vunpack.c.l.b16 %v473
        %v482 = vunpack.c.h.b16 %v473
        %v483 = vunpack.c.l.b16 %v474
        %v484 = vunpack.c.h.b16 %v474
        %v485 = vunpack.c.l.b16 %v475
        %v486 = vunpack.c.h.b16 %v475
        %v487 = vunpack.c.l.b16 %v476
        %v488 = vunpack.c.h.b16 %v476
        %v489 = vpack.c.b16 %v481, %v481
        %v490 = vpack.c.b16 %v482, %v482
        %v491 = vpack.c.b16 %v483, %v483
        %v492 = vpack.c.b16 %v484, %v484
        %v493 = vpack.c.b16 %v485, %v485
        %v494 = vpack.c.b16 %v486, %v486
        %v495 = vpack.c.b16 %v487, %v487
        %v496 = vpack.c.b16 %v488, %v488
        %vm505 = vcmask 257024
        %506 = vst.msk [vmem:[%s191] sm:$0xf] %vm505, %v489
        %507 = vst.msk [vmem:[%s191 + $0x4] sm:$0xf] %vm505, %v490
        %508 = vst.msk [vmem:[%s191 + $0x8] sm:$0xf] %vm505, %v491
        %509 = vst.msk [vmem:[%s191 + $0xc] sm:$0xf] %vm505, %v492
        %510 = vst.msk [vmem:[%s191 + $0x10] sm:$0xf] %vm505, %v493
        %511 = vst.msk [vmem:[%s191 + $0x14] sm:$0xf] %vm505, %v494
        %512 = vst.msk [vmem:[%s191 + $0x18] sm:$0xf] %vm505, %v495
        %513 = vst.msk [vmem:[%s191 + $0x1c] sm:$0xf] %vm505, %v496
        %522 = vrot.lane.b32.xlu0 %v292, 96
        %v523 = vpop.permute.xlu0 %522
        %524 = vrot.lane.b32.xlu0 %v295, 96
        %v525 = vpop.permute.xlu0 %524
        %526 = vrot.lane.b32.xlu0 %v300, 96
        %v527 = vpop.permute.xlu0 %526
        %528 = vrot.lane.b32.xlu0 %v303, 96
        %v529 = vpop.permute.xlu0 %528
        %530 = vrot.lane.b32.xlu0 %v308, 96
        %v531 = vpop.permute.xlu0 %530
        %532 = vrot.lane.b32.xlu0 %v311, 96
        %v533 = vpop.permute.xlu0 %532
        %534 = vrot.lane.b32.xlu0 %v316, 96
        %v535 = vpop.permute.xlu0 %534
        %536 = vrot.lane.b32.xlu0 %v319, 96
        %v537 = vpop.permute.xlu0 %536
        %v546 = vsel %vm336, %v523, 0.0
        %547 = vadd.xlane.f32.xlu0 %v546
        %v548 = vpop.xlane.xlu0 %547
        %v549 = vsel %vm336, %v525, 0.0
        %550 = vadd.xlane.f32.xlu0 %v549
        %v551 = vpop.xlane.xlu0 %550
        %v552 = vsel %vm336, %v527, 0.0
        %553 = vadd.xlane.f32.xlu0 %v552
        %v554 = vpop.xlane.xlu0 %553
        %v555 = vsel %vm336, %v529, 0.0
        %556 = vadd.xlane.f32.xlu0 %v555
        %v557 = vpop.xlane.xlu0 %556
        %v558 = vsel %vm336, %v531, 0.0
        %559 = vadd.xlane.f32.xlu0 %v558
        %v560 = vpop.xlane.xlu0 %559
        %v561 = vsel %vm336, %v533, 0.0
        %562 = vadd.xlane.f32.xlu0 %v561
        %v563 = vpop.xlane.xlu0 %562
        %v564 = vsel %vm336, %v535, 0.0
        %565 = vadd.xlane.f32.xlu0 %v564
        %v566 = vpop.xlane.xlu0 %565
        %v567 = vsel %vm336, %v537, 0.0
        %568 = vadd.xlane.f32.xlu0 %v567
        %v569 = vpop.xlane.xlu0 %568
        %v570 = vmul.f32 %v548, 0.03125
        %v571 = vmul.f32 %v551, 0.03125
        %v572 = vmul.f32 %v554, 0.03125
        %v573 = vmul.f32 %v557, 0.03125
        %v574 = vmul.f32 %v560, 0.03125
        %v575 = vmul.f32 %v563, 0.03125
        %v576 = vmul.f32 %v566, 0.03125
        %v577 = vmul.f32 %v569, 0.03125
        %586 = vrot.lane.b32.xlu0 %v369, 96
        %v587 = vpop.permute.xlu0 %586
        %588 = vrot.lane.b32.xlu0 %v370, 96
        %v589 = vpop.permute.xlu0 %588
        %590 = vrot.lane.b32.xlu0 %v371, 96
        %v591 = vpop.permute.xlu0 %590
        %592 = vrot.lane.b32.xlu0 %v372, 96
        %v593 = vpop.permute.xlu0 %592
        %594 = vrot.lane.b32.xlu0 %v373, 96
        %v595 = vpop.permute.xlu0 %594
        %596 = vrot.lane.b32.xlu0 %v374, 96
        %v597 = vpop.permute.xlu0 %596
        %598 = vrot.lane.b32.xlu0 %v375, 96
        %v599 = vpop.permute.xlu0 %598
        %600 = vrot.lane.b32.xlu0 %v376, 96
        %v601 = vpop.permute.xlu0 %600
        %v610 = vsel %vm336, %v587, 0.0
        %611 = vadd.xlane.f32.xlu0 %v610
        %v612 = vpop.xlane.xlu0 %611
        %v613 = vsel %vm336, %v589, 0.0
        %614 = vadd.xlane.f32.xlu0 %v613
        %v615 = vpop.xlane.xlu0 %614
        %v616 = vsel %vm336, %v591, 0.0
        %617 = vadd.xlane.f32.xlu0 %v616
        %v618 = vpop.xlane.xlu0 %617
        %v619 = vsel %vm336, %v593, 0.0
        %620 = vadd.xlane.f32.xlu0 %v619
        %v621 = vpop.xlane.xlu0 %620
        %v622 = vsel %vm336, %v595, 0.0
        %623 = vadd.xlane.f32.xlu0 %v622
        %v624 = vpop.xlane.xlu0 %623
        %v625 = vsel %vm336, %v597, 0.0
        %626 = vadd.xlane.f32.xlu0 %v625
        %v627 = vpop.xlane.xlu0 %626
        %v628 = vsel %vm336, %v599, 0.0
        %629 = vadd.xlane.f32.xlu0 %v628
        %v630 = vpop.xlane.xlu0 %629
        %v631 = vsel %vm336, %v601, 0.0
        %632 = vadd.xlane.f32.xlu0 %v631
        %v633 = vpop.xlane.xlu0 %632
        %v634 = vmul.f32 %v612, 0.03125
        %v635 = vmul.f32 %v615, 0.03125
        %v636 = vmul.f32 %v618, 0.03125
        %v637 = vmul.f32 %v621, 0.03125
        %v638 = vmul.f32 %v624, 0.03125
        %v639 = vmul.f32 %v627, 0.03125
        %v640 = vmul.f32 %v630, 0.03125
        %v641 = vmul.f32 %v633, 0.03125
        %v642 = vmul.f32 %v570, %v570
        %v643 = vmul.f32 %v571, %v571
        %v644 = vmul.f32 %v572, %v572
        %v645 = vmul.f32 %v573, %v573
        %v646 = vmul.f32 %v574, %v574
        %v647 = vmul.f32 %v575, %v575
        %v648 = vmul.f32 %v576, %v576
        %v649 = vmul.f32 %v577, %v577
        %v650 = vsub.f32 %v634, %v642
        %v651 = vsub.f32 %v635, %v643
        %v652 = vsub.f32 %v636, %v644
        %v653 = vsub.f32 %v637, %v645
        %v654 = vsub.f32 %v638, %v646
        %v655 = vsub.f32 %v639, %v647
        %v656 = vsub.f32 %v640, %v648
        %v657 = vsub.f32 %v641, %v649
        %v658 = vadd.f32 %v650, 1e-05
        %v659 = vadd.f32 %v651, 1e-05
        %v660 = vadd.f32 %v652, 1e-05
        %v661 = vadd.f32 %v653, 1e-05
        %v662 = vadd.f32 %v654, 1e-05
        %v663 = vadd.f32 %v655, 1e-05
        %v664 = vadd.f32 %v656, 1e-05
        %v665 = vadd.f32 %v657, 1e-05
        %v666 = vrsqrt.pop %v658
        %v667 = vrsqrt.pop %v659
        %v668 = vrsqrt.pop %v660
        %v669 = vrsqrt.pop %v661
        %v670 = vrsqrt.pop %v662
        %v671 = vrsqrt.pop %v663
        %v672 = vrsqrt.pop %v664
        %v673 = vrsqrt.pop %v665
        %v674 = vsub.f32 %v292, %v570
        %v675 = vsub.f32 %v295, %v571
        %v676 = vsub.f32 %v300, %v572
        %v677 = vsub.f32 %v303, %v573
        %v678 = vsub.f32 %v308, %v574
        %v679 = vsub.f32 %v311, %v575
        %v680 = vsub.f32 %v316, %v576
        %v681 = vsub.f32 %v319, %v577
        %v682 = vmul.f32 %v674, %v666
        %v683 = vmul.f32 %v675, %v667
        %v684 = vmul.f32 %v676, %v668
        %v685 = vmul.f32 %v677, %v669
        %v686 = vmul.f32 %v678, %v670
        %v687 = vmul.f32 %v679, %v671
        %v688 = vmul.f32 %v680, %v672
        %v689 = vmul.f32 %v681, %v673
        %690 = vrot.lane.b32.xlu0 %v327, 32
        %v691 = vpop.permute.xlu0 %690
        %v693 = vmul.f32 %v682, %v691
        %v694 = vmul.f32 %v683, %v691
        %v695 = vmul.f32 %v684, %v691
        %v696 = vmul.f32 %v685, %v691
        %v697 = vmul.f32 %v686, %v691
        %v698 = vmul.f32 %v687, %v691
        %v699 = vmul.f32 %v688, %v691
        %v700 = vmul.f32 %v689, %v691
        %701 = vrot.lane.b32.xlu0 %v334, 32
        %v702 = vpop.permute.xlu0 %701
        %v704 = vadd.f32 %v693, %v702
        %v705 = vadd.f32 %v694, %v702
        %v706 = vadd.f32 %v695, %v702
        %v707 = vadd.f32 %v696, %v702
        %v708 = vadd.f32 %v697, %v702
        %v709 = vadd.f32 %v698, %v702
        %v710 = vadd.f32 %v699, %v702
        %v711 = vadd.f32 %v700, %v702
        %v712 = vpack.c.bf16 %v705, %v704
        %v713 = vpack.c.bf16 %v707, %v706
        %v714 = vpack.c.bf16 %v709, %v708
        %v715 = vpack.c.bf16 %v711, %v710
        %v720 = vunpack.c.l.b16 %v712
        %v721 = vunpack.c.h.b16 %v712
        %v722 = vunpack.c.l.b16 %v713
        %v723 = vunpack.c.h.b16 %v713
        %v724 = vunpack.c.l.b16 %v714
        %v725 = vunpack.c.h.b16 %v714
        %v726 = vunpack.c.l.b16 %v715
        %v727 = vunpack.c.h.b16 %v715
        %v728 = vpack.c.b16 %v720, %v720
        %v729 = vpack.c.b16 %v721, %v721
        %v730 = vpack.c.b16 %v722, %v722
        %v731 = vpack.c.b16 %v723, %v723
        %v732 = vpack.c.b16 %v724, %v724
        %v733 = vpack.c.b16 %v725, %v725
        %v734 = vpack.c.b16 %v726, %v726
        %v735 = vpack.c.b16 %v727, %v727
        %vm744 = vcmask 519424
        %745 = vst.msk [vmem:[%s191] sm:$0xf] %vm744, %v728
        %746 = vst.msk [vmem:[%s191 + $0x4] sm:$0xf] %vm744, %v729
        %747 = vst.msk [vmem:[%s191 + $0x8] sm:$0xf] %vm744, %v730
        %748 = vst.msk [vmem:[%s191 + $0xc] sm:$0xf] %vm744, %v731
        %749 = vst.msk [vmem:[%s191 + $0x10] sm:$0xf] %vm744, %v732
        %750 = vst.msk [vmem:[%s191 + $0x14] sm:$0xf] %vm744, %v733
        %751 = vst.msk [vmem:[%s191 + $0x18] sm:$0xf] %vm744, %v734
        %752 = vst.msk [vmem:[%s191 + $0x1c] sm:$0xf] %vm744, %v735
        %753 = vrot.lane.b32.xlu0 %v292, 64
        %v754 = vpop.permute.xlu0 %753
        %755 = vrot.lane.b32.xlu0 %v295, 64
        %v756 = vpop.permute.xlu0 %755
        %757 = vrot.lane.b32.xlu0 %v300, 64
        %v758 = vpop.permute.xlu0 %757
        %759 = vrot.lane.b32.xlu0 %v303, 64
        %v760 = vpop.permute.xlu0 %759
        %761 = vrot.lane.b32.xlu0 %v308, 64
        %v762 = vpop.permute.xlu0 %761
        %763 = vrot.lane.b32.xlu0 %v311, 64
        %v764 = vpop.permute.xlu0 %763
        %765 = vrot.lane.b32.xlu0 %v316, 64
        %v766 = vpop.permute.xlu0 %765
        %767 = vrot.lane.b32.xlu0 %v319, 64
        %v768 = vpop.permute.xlu0 %767
        %v777 = vsel %vm336, %v754, 0.0
        %778 = vadd.xlane.f32.xlu0 %v777
        %v779 = vpop.xlane.xlu0 %778
        %v780 = vsel %vm336, %v756, 0.0
        %781 = vadd.xlane.f32.xlu0 %v780
        %v782 = vpop.xlane.xlu0 %781
        %v783 = vsel %vm336, %v758, 0.0
        %784 = vadd.xlane.f32.xlu0 %v783
        %v785 = vpop.xlane.xlu0 %784
        %v786 = vsel %vm336, %v760, 0.0
        %787 = vadd.xlane.f32.xlu0 %v786
        %v788 = vpop.xlane.xlu0 %787
        %v789 = vsel %vm336, %v762, 0.0
        %790 = vadd.xlane.f32.xlu0 %v789
        %v791 = vpop.xlane.xlu0 %790
        %v792 = vsel %vm336, %v764, 0.0
        %793 = vadd.xlane.f32.xlu0 %v792
        %v794 = vpop.xlane.xlu0 %793
        %v795 = vsel %vm336, %v766, 0.0
        %796 = vadd.xlane.f32.xlu0 %v795
        %v797 = vpop.xlane.xlu0 %796
        %v798 = vsel %vm336, %v768, 0.0
        %799 = vadd.xlane.f32.xlu0 %v798
        %v800 = vpop.xlane.xlu0 %799
        %v801 = vmul.f32 %v779, 0.03125
        %v802 = vmul.f32 %v782, 0.03125
        %v803 = vmul.f32 %v785, 0.03125
        %v804 = vmul.f32 %v788, 0.03125
        %v805 = vmul.f32 %v791, 0.03125
        %v806 = vmul.f32 %v794, 0.03125
        %v807 = vmul.f32 %v797, 0.03125
        %v808 = vmul.f32 %v800, 0.03125
        %809 = vrot.lane.b32.xlu0 %v369, 64
        %v810 = vpop.permute.xlu0 %809
        %811 = vrot.lane.b32.xlu0 %v370, 64
        %v812 = vpop.permute.xlu0 %811
        %813 = vrot.lane.b32.xlu0 %v371, 64
        %v814 = vpop.permute.xlu0 %813
        %815 = vrot.lane.b32.xlu0 %v372, 64
        %v816 = vpop.permute.xlu0 %815
        %817 = vrot.lane.b32.xlu0 %v373, 64
        %v818 = vpop.permute.xlu0 %817
        %819 = vrot.lane.b32.xlu0 %v374, 64
        %v820 = vpop.permute.xlu0 %819
        %821 = vrot.lane.b32.xlu0 %v375, 64
        %v822 = vpop.permute.xlu0 %821
        %823 = vrot.lane.b32.xlu0 %v376, 64
        %v824 = vpop.permute.xlu0 %823
        %v833 = vsel %vm336, %v810, 0.0
        %834 = vadd.xlane.f32.xlu0 %v833
        %v835 = vpop.xlane.xlu0 %834
        %v836 = vsel %vm336, %v812, 0.0
        %837 = vadd.xlane.f32.xlu0 %v836
        %v838 = vpop.xlane.xlu0 %837
        %v839 = vsel %vm336, %v814, 0.0
        %840 = vadd.xlane.f32.xlu0 %v839
        %v841 = vpop.xlane.xlu0 %840
        %v842 = vsel %vm336, %v816, 0.0
        %843 = vadd.xlane.f32.xlu0 %v842
        %v844 = vpop.xlane.xlu0 %843
        %v845 = vsel %vm336, %v818, 0.0
        %846 = vadd.xlane.f32.xlu0 %v845
        %v847 = vpop.xlane.xlu0 %846
        %v848 = vsel %vm336, %v820, 0.0
        %849 = vadd.xlane.f32.xlu0 %v848
        %v850 = vpop.xlane.xlu0 %849
        %v851 = vsel %vm336, %v822, 0.0
        %852 = vadd.xlane.f32.xlu0 %v851
        %v853 = vpop.xlane.xlu0 %852
        %v854 = vsel %vm336, %v824, 0.0
        %855 = vadd.xlane.f32.xlu0 %v854
        %v856 = vpop.xlane.xlu0 %855
        %v857 = vmul.f32 %v835, 0.03125
        %v858 = vmul.f32 %v838, 0.03125
        %v859 = vmul.f32 %v841, 0.03125
        %v860 = vmul.f32 %v844, 0.03125
        %v861 = vmul.f32 %v847, 0.03125
        %v862 = vmul.f32 %v850, 0.03125
        %v863 = vmul.f32 %v853, 0.03125
        %v864 = vmul.f32 %v856, 0.03125
        %v865 = vmul.f32 %v801, %v801
        %v866 = vmul.f32 %v802, %v802
        %v867 = vmul.f32 %v803, %v803
        %v868 = vmul.f32 %v804, %v804
        %v869 = vmul.f32 %v805, %v805
        %v870 = vmul.f32 %v806, %v806
        %v871 = vmul.f32 %v807, %v807
        %v872 = vmul.f32 %v808, %v808
        %v873 = vsub.f32 %v857, %v865
        %v874 = vsub.f32 %v858, %v866
        %v875 = vsub.f32 %v859, %v867
        %v876 = vsub.f32 %v860, %v868
        %v877 = vsub.f32 %v861, %v869
        %v878 = vsub.f32 %v862, %v870
        %v879 = vsub.f32 %v863, %v871
        %v880 = vsub.f32 %v864, %v872
        %v881 = vadd.f32 %v873, 1e-05
        %v882 = vadd.f32 %v874, 1e-05
        %v883 = vadd.f32 %v875, 1e-05
        %v884 = vadd.f32 %v876, 1e-05
        %v885 = vadd.f32 %v877, 1e-05
        %v886 = vadd.f32 %v878, 1e-05
        %v887 = vadd.f32 %v879, 1e-05
        %v888 = vadd.f32 %v880, 1e-05
        %v889 = vrsqrt.pop %v881
        %v890 = vrsqrt.pop %v882
        %v891 = vrsqrt.pop %v883
        %v892 = vrsqrt.pop %v884
        %v893 = vrsqrt.pop %v885
        %v894 = vrsqrt.pop %v886
        %v895 = vrsqrt.pop %v887
        %v896 = vrsqrt.pop %v888
        %v897 = vsub.f32 %v292, %v801
        %v898 = vsub.f32 %v295, %v802
        %v899 = vsub.f32 %v300, %v803
        %v900 = vsub.f32 %v303, %v804
        %v901 = vsub.f32 %v308, %v805
        %v902 = vsub.f32 %v311, %v806
        %v903 = vsub.f32 %v316, %v807
        %v904 = vsub.f32 %v319, %v808
        %v905 = vmul.f32 %v897, %v889
        %v906 = vmul.f32 %v898, %v890
        %v907 = vmul.f32 %v899, %v891
        %v908 = vmul.f32 %v900, %v892
        %v909 = vmul.f32 %v901, %v893
        %v910 = vmul.f32 %v902, %v894
        %v911 = vmul.f32 %v903, %v895
        %v912 = vmul.f32 %v904, %v896
        %913 = vrot.lane.b32.xlu0 %v327, 64
        %v914 = vpop.permute.xlu0 %913
        %v916 = vmul.f32 %v905, %v914
        %v917 = vmul.f32 %v906, %v914
        %v918 = vmul.f32 %v907, %v914
        %v919 = vmul.f32 %v908, %v914
        %v920 = vmul.f32 %v909, %v914
        %v921 = vmul.f32 %v910, %v914
        %v922 = vmul.f32 %v911, %v914
        %v923 = vmul.f32 %v912, %v914
        %924 = vrot.lane.b32.xlu0 %v334, 64
        %v925 = vpop.permute.xlu0 %924
        %v927 = vadd.f32 %v916, %v925
        %v928 = vadd.f32 %v917, %v925
        %v929 = vadd.f32 %v918, %v925
        %v930 = vadd.f32 %v919, %v925
        %v931 = vadd.f32 %v920, %v925
        %v932 = vadd.f32 %v921, %v925
        %v933 = vadd.f32 %v922, %v925
        %v934 = vadd.f32 %v923, %v925
        %v935 = vpack.c.bf16 %v928, %v927
        %v936 = vpack.c.bf16 %v930, %v929
        %v937 = vpack.c.bf16 %v932, %v931
        %v938 = vpack.c.bf16 %v934, %v933
        %v943 = vunpack.c.l.b16 %v935
        %v944 = vunpack.c.h.b16 %v935
        %v945 = vunpack.c.l.b16 %v936
        %v946 = vunpack.c.h.b16 %v936
        %v947 = vunpack.c.l.b16 %v937
        %v948 = vunpack.c.h.b16 %v937
        %v949 = vunpack.c.l.b16 %v938
        %v950 = vunpack.c.h.b16 %v938
        %v951 = vpack.c.b16 %v943, %v943
        %v952 = vpack.c.b16 %v944, %v944
        %v953 = vpack.c.b16 %v945, %v945
        %v954 = vpack.c.b16 %v946, %v946
        %v955 = vpack.c.b16 %v947, %v947
        %v956 = vpack.c.b16 %v948, %v948
        %v957 = vpack.c.b16 %v949, %v949
        %v958 = vpack.c.b16 %v950, %v950
        %vm967 = vcmask 781824
        %968 = vst.msk [vmem:[%s191] sm:$0xf] %vm967, %v951
        %969 = vst.msk [vmem:[%s191 + $0x4] sm:$0xf] %vm967, %v952
        %970 = vst.msk [vmem:[%s191 + $0x8] sm:$0xf] %vm967, %v953
        %971 = vst.msk [vmem:[%s191 + $0xc] sm:$0xf] %vm967, %v954
        %972 = vst.msk [vmem:[%s191 + $0x10] sm:$0xf] %vm967, %v955
        %973 = vst.msk [vmem:[%s191 + $0x14] sm:$0xf] %vm967, %v956
        %974 = vst.msk [vmem:[%s191 + $0x18] sm:$0xf] %vm967, %v957
        %975 = vst.msk [vmem:[%s191 + $0x1c] sm:$0xf] %vm967, %v958
        %976 = vrot.lane.b32.xlu0 %v292, 32
        %v977 = vpop.permute.xlu0 %976
        %978 = vrot.lane.b32.xlu0 %v295, 32
        %v979 = vpop.permute.xlu0 %978
        %980 = vrot.lane.b32.xlu0 %v300, 32
        %v981 = vpop.permute.xlu0 %980
        %982 = vrot.lane.b32.xlu0 %v303, 32
        %v983 = vpop.permute.xlu0 %982
        %984 = vrot.lane.b32.xlu0 %v308, 32
        %v985 = vpop.permute.xlu0 %984
        %986 = vrot.lane.b32.xlu0 %v311, 32
        %v987 = vpop.permute.xlu0 %986
        %988 = vrot.lane.b32.xlu0 %v316, 32
        %v989 = vpop.permute.xlu0 %988
        %990 = vrot.lane.b32.xlu0 %v319, 32
        %v991 = vpop.permute.xlu0 %990
        %v1000 = vsel %vm336, %v977, 0.0
        %1001 = vadd.xlane.f32.xlu0 %v1000
        %v1002 = vpop.xlane.xlu0 %1001
        %v1003 = vsel %vm336, %v979, 0.0
        %1004 = vadd.xlane.f32.xlu0 %v1003
        %v1005 = vpop.xlane.xlu0 %1004
        %v1006 = vsel %vm336, %v981, 0.0
        %1007 = vadd.xlane.f32.xlu0 %v1006
        %v1008 = vpop.xlane.xlu0 %1007
        %v1009 = vsel %vm336, %v983, 0.0
        %1010 = vadd.xlane.f32.xlu0 %v1009
        %v1011 = vpop.xlane.xlu0 %1010
        %v1012 = vsel %vm336, %v985, 0.0
        %1013 = vadd.xlane.f32.xlu0 %v1012
        %v1014 = vpop.xlane.xlu0 %1013
        %v1015 = vsel %vm336, %v987, 0.0
        %1016 = vadd.xlane.f32.xlu0 %v1015
        %v1017 = vpop.xlane.xlu0 %1016
        %v1018 = vsel %vm336, %v989, 0.0
        %1019 = vadd.xlane.f32.xlu0 %v1018
        %v1020 = vpop.xlane.xlu0 %1019
        %v1021 = vsel %vm336, %v991, 0.0
        %1022 = vadd.xlane.f32.xlu0 %v1021
        %v1023 = vpop.xlane.xlu0 %1022
        %v1024 = vmul.f32 %v1002, 0.03125
        %v1025 = vmul.f32 %v1005, 0.03125
        %v1026 = vmul.f32 %v1008, 0.03125
        %v1027 = vmul.f32 %v1011, 0.03125
        %v1028 = vmul.f32 %v1014, 0.03125
        %v1029 = vmul.f32 %v1017, 0.03125
        %v1030 = vmul.f32 %v1020, 0.03125
        %v1031 = vmul.f32 %v1023, 0.03125
        %1032 = vrot.lane.b32.xlu0 %v369, 32
        %v1033 = vpop.permute.xlu0 %1032
        %1034 = vrot.lane.b32.xlu0 %v370, 32
        %v1035 = vpop.permute.xlu0 %1034
        %1036 = vrot.lane.b32.xlu0 %v371, 32
        %v1037 = vpop.permute.xlu0 %1036
        %1038 = vrot.lane.b32.xlu0 %v372, 32
        %v1039 = vpop.permute.xlu0 %1038
        %1040 = vrot.lane.b32.xlu0 %v373, 32
        %v1041 = vpop.permute.xlu0 %1040
        %1042 = vrot.lane.b32.xlu0 %v374, 32
        %v1043 = vpop.permute.xlu0 %1042
        %1044 = vrot.lane.b32.xlu0 %v375, 32
        %v1045 = vpop.permute.xlu0 %1044
        %1046 = vrot.lane.b32.xlu0 %v376, 32
        %v1047 = vpop.permute.xlu0 %1046
        %v1056 = vsel %vm336, %v1033, 0.0
        %1057 = vadd.xlane.f32.xlu0 %v1056
        %v1058 = vpop.xlane.xlu0 %1057
        %v1059 = vsel %vm336, %v1035, 0.0
        %1060 = vadd.xlane.f32.xlu0 %v1059
        %v1061 = vpop.xlane.xlu0 %1060
        %v1062 = vsel %vm336, %v1037, 0.0
        %1063 = vadd.xlane.f32.xlu0 %v1062
        %v1064 = vpop.xlane.xlu0 %1063
        %v1065 = vsel %vm336, %v1039, 0.0
        %1066 = vadd.xlane.f32.xlu0 %v1065
        %v1067 = vpop.xlane.xlu0 %1066
        %v1068 = vsel %vm336, %v1041, 0.0
        %1069 = vadd.xlane.f32.xlu0 %v1068
        %v1070 = vpop.xlane.xlu0 %1069
        %v1071 = vsel %vm336, %v1043, 0.0
        %1072 = vadd.xlane.f32.xlu0 %v1071
        %v1073 = vpop.xlane.xlu0 %1072
        %v1074 = vsel %vm336, %v1045, 0.0
        %1075 = vadd.xlane.f32.xlu0 %v1074
        %v1076 = vpop.xlane.xlu0 %1075
        %v1077 = vsel %vm336, %v1047, 0.0
        %1078 = vadd.xlane.f32.xlu0 %v1077
        %v1079 = vpop.xlane.xlu0 %1078
        %v1080 = vmul.f32 %v1058, 0.03125
        %v1081 = vmul.f32 %v1061, 0.03125
        %v1082 = vmul.f32 %v1064, 0.03125
        %v1083 = vmul.f32 %v1067, 0.03125
        %v1084 = vmul.f32 %v1070, 0.03125
        %v1085 = vmul.f32 %v1073, 0.03125
        %v1086 = vmul.f32 %v1076, 0.03125
        %v1087 = vmul.f32 %v1079, 0.03125
        %v1088 = vmul.f32 %v1024, %v1024
        %v1089 = vmul.f32 %v1025, %v1025
        %v1090 = vmul.f32 %v1026, %v1026
        %v1091 = vmul.f32 %v1027, %v1027
        %v1092 = vmul.f32 %v1028, %v1028
        %v1093 = vmul.f32 %v1029, %v1029
        %v1094 = vmul.f32 %v1030, %v1030
        %v1095 = vmul.f32 %v1031, %v1031
        %v1096 = vsub.f32 %v1080, %v1088
        %v1097 = vsub.f32 %v1081, %v1089
        %v1098 = vsub.f32 %v1082, %v1090
        %v1099 = vsub.f32 %v1083, %v1091
        %v1100 = vsub.f32 %v1084, %v1092
        %v1101 = vsub.f32 %v1085, %v1093
        %v1102 = vsub.f32 %v1086, %v1094
        %v1103 = vsub.f32 %v1087, %v1095
        %v1104 = vadd.f32 %v1096, 1e-05
        %v1105 = vadd.f32 %v1097, 1e-05
        %v1106 = vadd.f32 %v1098, 1e-05
        %v1107 = vadd.f32 %v1099, 1e-05
        %v1108 = vadd.f32 %v1100, 1e-05
        %v1109 = vadd.f32 %v1101, 1e-05
        %v1110 = vadd.f32 %v1102, 1e-05
        %v1111 = vadd.f32 %v1103, 1e-05
        %v1112 = vrsqrt.pop %v1104
        %v1113 = vrsqrt.pop %v1105
        %v1114 = vrsqrt.pop %v1106
        %v1115 = vrsqrt.pop %v1107
        %v1116 = vrsqrt.pop %v1108
        %v1117 = vrsqrt.pop %v1109
        %v1118 = vrsqrt.pop %v1110
        %v1119 = vrsqrt.pop %v1111
        %v1120 = vsub.f32 %v292, %v1024
        %v1121 = vsub.f32 %v295, %v1025
        %v1122 = vsub.f32 %v300, %v1026
        %v1123 = vsub.f32 %v303, %v1027
        %v1124 = vsub.f32 %v308, %v1028
        %v1125 = vsub.f32 %v311, %v1029
        %v1126 = vsub.f32 %v316, %v1030
        %v1127 = vsub.f32 %v319, %v1031
        %v1128 = vmul.f32 %v1120, %v1112
        %v1129 = vmul.f32 %v1121, %v1113
        %v1130 = vmul.f32 %v1122, %v1114
        %v1131 = vmul.f32 %v1123, %v1115
        %v1132 = vmul.f32 %v1124, %v1116
        %v1133 = vmul.f32 %v1125, %v1117
        %v1134 = vmul.f32 %v1126, %v1118
        %v1135 = vmul.f32 %v1127, %v1119
        %1136 = vrot.lane.b32.xlu0 %v327, 96
        %v1137 = vpop.permute.xlu0 %1136
        %v1139 = vmul.f32 %v1128, %v1137
        %v1140 = vmul.f32 %v1129, %v1137
        %v1141 = vmul.f32 %v1130, %v1137
        %v1142 = vmul.f32 %v1131, %v1137
        %v1143 = vmul.f32 %v1132, %v1137
        %v1144 = vmul.f32 %v1133, %v1137
        %v1145 = vmul.f32 %v1134, %v1137
        %v1146 = vmul.f32 %v1135, %v1137
        %1147 = vrot.lane.b32.xlu0 %v334, 96
        %v1148 = vpop.permute.xlu0 %1147
        %v1150 = vadd.f32 %v1139, %v1148
        %v1151 = vadd.f32 %v1140, %v1148
        %v1152 = vadd.f32 %v1141, %v1148
        %v1153 = vadd.f32 %v1142, %v1148
        %v1154 = vadd.f32 %v1143, %v1148
        %v1155 = vadd.f32 %v1144, %v1148
        %v1156 = vadd.f32 %v1145, %v1148
        %v1157 = vadd.f32 %v1146, %v1148
        %v1158 = vpack.c.bf16 %v1151, %v1150
        %v1159 = vpack.c.bf16 %v1153, %v1152
        %v1160 = vpack.c.bf16 %v1155, %v1154
        %v1161 = vpack.c.bf16 %v1157, %v1156
        %v1166 = vunpack.c.l.b16 %v1158
        %v1167 = vunpack.c.h.b16 %v1158
        %v1168 = vunpack.c.l.b16 %v1159
        %v1169 = vunpack.c.h.b16 %v1159
        %v1170 = vunpack.c.l.b16 %v1160
        %v1171 = vunpack.c.h.b16 %v1160
        %v1172 = vunpack.c.l.b16 %v1161
        %v1173 = vunpack.c.h.b16 %v1161
        %v1174 = vpack.c.b16 %v1166, %v1166
        %v1175 = vpack.c.b16 %v1167, %v1167
        %v1176 = vpack.c.b16 %v1168, %v1168
        %v1177 = vpack.c.b16 %v1169, %v1169
        %v1178 = vpack.c.b16 %v1170, %v1170
        %v1179 = vpack.c.b16 %v1171, %v1171
        %v1180 = vpack.c.b16 %v1172, %v1172
        %v1181 = vpack.c.b16 %v1173, %v1173
        %vm1190 = vcmask 1044224
        %1191 = vst.msk [vmem:[%s191] sm:$0xf] %vm1190, %v1174
        %1192 = vst.msk [vmem:[%s191 + $0x4] sm:$0xf] %vm1190, %v1175
        %1193 = vst.msk [vmem:[%s191 + $0x8] sm:$0xf] %vm1190, %v1176
        %1194 = vst.msk [vmem:[%s191 + $0xc] sm:$0xf] %vm1190, %v1177
        %1195 = vst.msk [vmem:[%s191 + $0x10] sm:$0xf] %vm1190, %v1178
        %1196 = vst.msk [vmem:[%s191 + $0x14] sm:$0xf] %vm1190, %v1179
        %1197 = vst.msk [vmem:[%s191 + $0x18] sm:$0xf] %vm1190, %v1180
        %1198 = vst.msk [vmem:[%s191 + $0x1c] sm:$0xf] %vm1190, %v1181
        %s1199 = sand.u32 %s115, 1
        %s1200 = scalar_lea.sflag [#allocation3], %s1199
        %s1201 = sand.u32 %s115, 1
        %s1202 = smul.addr %s1201, 32
        %s1203 = scalar_lea.vmem [#allocation2], %s1202
        // Predicated region
        $region37: #{tpu_custom_call.1} parent=35 // pred_check
          %p1204 = pneg %p125
        $region38: #{tpu_custom_call.1} parent=35 // pred_check_branch
          %1206 = sbr.rel (%p1204) target = $region40
        $region39: #{tpu_custom_call.1} parent=35 // pred_region
          %s1207 = smul.u32 8, %s18
          %s1209 = ssub.s32 512, 512
          %1210 = vsyncadd %s1200, %s1209
          %s1211 = smul.addr %s1207, 64
          %s1212 = scalar_lea.hbm %s4, %s1211
          %s1213 = sshll.u32 %s1203, 4
          %s1214 = int_to_ptr.vmem [resolvable:$true] %s1213
          %1219 = dma.vmem_to_hbm [thread:$0]  %s1214, 512, %s1212, %s1200, 64, 64, 4
        $region40: #{tpu_custom_call.1} parent=35 // pred_fallthru
          _
      $region36: #{tpu_custom_call.1} parent=5 // pred_fallthru
        _
      %p1220 = scmp.le.s32.totalorder 2, %s13
      // Predicated region
      $region41: #{tpu_custom_call.1} parent=5 // pred_check
        %p1221 = pneg %p1220
      $region42: #{tpu_custom_call.1} parent=5 // pred_check_branch
        %1223 = sbr.rel (%p1221) target = $region44
      $region43: #{tpu_custom_call.1} parent=5 // pred_region
        %s1224 = ssub.s32 %s13, 2
        // Predicated region
        $region45: #{tpu_custom_call.1} parent=43 // pred_check
          %p1225 = pneg %p131
        $region46: #{tpu_custom_call.1} parent=43 // pred_check_branch
          %1227 = sbr.rel (%p1225) target = $region48
        $region47: #{tpu_custom_call.1} parent=43 // pred_region
          %s1228 = sand.u32 %s116, 1
          %s1229 = scalar_lea.sflag [#allocation3], %s1228
          %s1230 = sand.u32 %s116, 1
          %s1231 = smul.addr %s1230, 32
          %s1232 = scalar_lea.vmem [#allocation2], %s1231
          %1233 = dma.done %s1229, 512
        $region48: #{tpu_custom_call.1} parent=43 // pred_fallthru
          _
      $region44: #{tpu_custom_call.1} parent=5 // pred_fallthru
        _
    $region6: #{tpu_custom_call.1} parent=1 // loop_footer
      %s17 = sadd.s32 1, %s13
    $region7: #{tpu_custom_call.1} parent=1 // loop_footer_branch
      %12 = sbr.rel target = $region3
    $region8: #{tpu_custom_call.1} parent=1 // loop_exit
      _
    %1234 = vsyncpa [#allocation3], 1
    %s1235 = scalar_lea.sflag [#allocation3], 1
    %1236 = vsyncpa %s1235, 1

</llo_original>
